<compile_context>
chip_gen: v7x
topology: tpu7x:2x2x1
jax: 0.10.0
libtpu: 0.0.40
codegen_flags: <defaults>
</compile_context>

<pallas_src>
from functools import partial

import jax
import jax.numpy as jnp
from jax.experimental import pallas as pl
from jax.experimental.pallas import tpu as pltpu

TEMPERATURE = 0.07
SCALE_BY_TEMPERATURE = True
_EPS = 1e-12  # F.normalize eps


def _round_up(x, m):
    return ((x + m - 1) // m) * m


def _vmem_capacity_bytes():
    try:
        return int(pltpu.get_tpu_info().vmem_capacity_bytes)
    except Exception:
        return 64 * 1024 * 1024  # conservative (v7x per-TC VMEM)


def _choose_tiles(b, dp, stream_bytes, vmem_cap):
    """Pick (TM, TN).  TN = 256 (MXU width); TM grows while the double-buffered
    q/k streams fit ~1/3 of VMEM and the parallel row axis keeps >= 2 blocks."""
    if b <= 512:
        t = _round_up(b, 8)
        return t, t
    tn = 256
    tm = 512
    budget = vmem_cap // 3
    while tm < 2048:
        nxt = tm * 2
        vmem_need = (2 * nxt + 3 * tn) * dp * stream_bytes  # 2x q bufs + 3x k bufs
        if vmem_need > budget:
            break
        if (b + nxt - 1) // nxt < 2:  # keep >=2 row tiles (v7x has 2 TensorCores)
            break
        tm = nxt
    # TODO(synk): for very large Dp, add a D-chunk inner pipeline
    # (pltpu.emit_pipeline over Dp with an f32 accumulator) instead of shrinking TM.
    return tm, tn


def _key_block_spec(tn, dp, gk):
    """Key-tile spec; triple-buffered when the reduction axis is long enough."""
    idx = lambda i, k: (k, 0)
    if gk >= 3:
        try:
            return pl.BlockSpec((tn, dp), idx, pipeline_mode=pl.Buffered(buffer_count=3))
        except Exception:
            pass  # older jax without pipeline_mode: default double buffering
    return pl.BlockSpec((tn, dp), idx)


def _logz_kernel(xq_ref, xk_ref, logz_ref, l_sc, *,
                 inv_temp, b_real, tm, tn, mxu_dtype):
    """Grid = (row tiles, key tiles); the key axis (innermost) is the reduction.

    Per-row state in VMEM scratch:
      l_sc  running sum over valid j of exp(sim_ij/T - 1/T)
    (constant shift 1/T is the exact row max for cosine logits, so no online max)
    Finalize: logZ_i = 1/T + log(l_i).
    """
    i = pl.program_id(0)
    kv = pl.program_id(1)

    @pl.when(kv == 0)
    def _():
        l_sc[...] = jnp.zeros_like(l_sc)

    # (TM, TN) similarity tile on the MXU; f32 accumulation.  Inputs are
    # already L2-normalized in the wrapper.
    q = xq_ref[...].astype(mxu_dtype)
    k = xk_ref[...].astype(mxu_dtype)
    s = jax.lax.dot_general(q, k, (((1,), (1,)), ((), ())),
                            preferred_element_type=jnp.float32) * inv_temp

    # Exact exclusion of the diagonal (self-similarity) and of zero-padded
    # batch columns.  This also makes zero-norm rows match the reference
    # (their row reduces to log(B-1)) and keeps padded rows finite.
    row_ids = i * tm + jax.lax.broadcasted_iota(jnp.int32, (tm, tn), 0)
    col_ids = kv * tn + jax.lax.broadcasted_iota(jnp.int32, (tm, tn), 1)
    valid = jnp.logical_and(row_ids != col_ids, col_ids < b_real)

    # cosine sims <= ~1, so s - 1/T <= ~0: exp never overflows.
    p = jnp.where(valid, jnp.exp(s - inv_temp), 0.0)
    l_sc[...] += jnp.sum(p, axis=1, keepdims=True)

    @pl.when(kv == pl.num_programs(1) - 1)
    def _():
        logz_ref[...] = inv_temp + jnp.log(l_sc[...])


def cosine_loss(out, row, col, *, temperature=TEMPERATURE,
                scale_by_temperature=SCALE_BY_TEMPERATURE,
                mxu_dtype=jnp.bfloat16):
    """out: (B, D) float; row, col: int index arrays of the positive pairs.

    mxu_dtype=jnp.bfloat16 (default, fast): bf16 streams + bf16 MXU operands,
    f32 accumulation.  mxu_dtype=jnp.float32: slow path, tighter agreement with
    the f32 reference.
    """
    out = jnp.asarray(out, jnp.float32)
    row = jnp.asarray(row, jnp.int32)
    col = jnp.asarray(col, jnp.int32)
    B, D = out.shape
    num_pos = int(row.shape[0])
    if num_pos == 0:
        # PyTorch would produce NaN from mean over an empty gather; guard here.
        raise ValueError("cosine_loss: no positive pairs (empty row/col).")
    inv_temp = 1.0 / float(temperature)

    # F.normalize(x, p=2, dim=1)  ->  x * rsqrt(max(sum(x^2), eps^2)) ; done ONCE.
    xn = out * jax.lax.rsqrt(
        jnp.maximum(jnp.sum(out * out, axis=1, keepdims=True), _EPS * _EPS))

    # Positive-pair numerator: P-length gather + row-wise dot (no BxB matrix,
    # no dense mask).  f32, highest matmul precision.
    s_pos = jnp.einsum("pd,pd->p", xn[row], xn[col],
                       precision=jax.lax.Precision.HIGHEST) * inv_temp

    # ---- tiling / padding -------------------------------------------------
    stream_dtype = jnp.float32 if mxu_dtype == jnp.float32 else jnp.bfloat16
    stream_bytes = jnp.dtype(stream_dtype).itemsize
    Dp = max(128, _round_up(D, 128))          # lane-dense, MXU-aligned contraction
    vmem_cap = _vmem_capacity_bytes()
    TM, TN = _choose_tiles(B, Dp, stream_bytes, vmem_cap)
    Bp = _round_up(B, TM)                      # TM is a multiple of TN (or equal)
    Gm, Gk = Bp // TM, Bp // TN

    # Zero-pad (padding changes no norm/dot; padded cols masked in-kernel).
    xp = jnp.zeros((Bp, Dp), stream_dtype).at[:B, :D].set(xn.astype(stream_dtype))

    kernel = partial(_logz_kernel, inv_temp=inv_temp, b_real=B, tm=TM, tn=TN,
                     mxu_dtype=mxu_dtype)

    cost = pl.CostEstimate(
        flops=2 * Bp * Bp * Dp + 6 * Bp * Bp,
        transcendentals=Bp * Bp + Bp,
        bytes_accessed=(Gm * Bp * Dp + Bp * Dp) * stream_bytes + Bp * 4,
    )

    vmem_limit = min(int(vmem_cap * 0.8), 104 * 1024 * 1024)

    logz = pl.pallas_call(
        kernel,
        out_shape=jax.ShapeDtypeStruct((Bp, 1), jnp.float32),
        grid_spec=pltpu.PrefetchScalarGridSpec(
            num_scalar_prefetch=0,
            grid=(Gm, Gk),
            in_specs=[pl.BlockSpec((TM, Dp), lambda i, k: (i, 0)),  # query rows
                      _key_block_spec(TN, Dp, Gk)],                 # key rows
            out_specs=pl.BlockSpec((TM, 1), lambda i, k: (i, 0)),
            scratch_shapes=[pltpu.VMEM((TM, 1), jnp.float32)]),
        compiler_params=pltpu.CompilerParams(
            dimension_semantics=("parallel", "arbitrary"),
            vmem_limit_bytes=vmem_limit),
        cost_estimate=cost,
    )(xp, xp)

    # loss = -mean_p( s_pos[p] - logZ[row[p]] ); num_pos is a trace-time constant.
    loss = (jnp.sum(logz[row, 0]) - jnp.sum(s_pos)) / num_pos
    if scale_by_temperature:
        loss = loss * temperature
    # TODO(synk): PyTorch raises ValueError on NaN in log_probs; there is no
    # in-kernel exception path, so the runtime NaN check is omitted.
    return loss


def _reference_loss(out, row, col, temperature=TEMPERATURE,
                    scale_by_temperature=SCALE_BY_TEMPERATURE):
    B = out.shape[0]
    xn = out / jnp.maximum(jnp.linalg.norm(out, axis=1, keepdims=True), 1e-12)
    sim = jnp.matmul(xn, xn.T, precision=jax.lax.Precision.HIGHEST) / temperature
    sim = sim - jnp.max(sim, axis=1, keepdims=True)
    logits_mask = 1.0 - jnp.eye(B, dtype=jnp.float32)
    exp_logits = jnp.exp(sim) * logits_mask
    log_probs = sim - jnp.log(jnp.sum(exp_logits, axis=1, keepdims=True))
    loss = -jnp.mean(log_probs[row, col])
    if scale_by_temperature:
        loss = loss * temperature
    return loss


if __name__ == "__main__":
    key = jax.random.PRNGKey(0)
    B, D = 8, 32
    out = jax.random.normal(key, (B, D), dtype=jnp.float32)

    # Deterministic synthetic sparse positive-pair mask: samples with the same
    # label are positives (off-diagonal); labels = [0,0,1,1,2,2,3,3].
    # (mask.storage.value() is unused by the PyTorch forward, so it is omitted)
    labels = [0, 0, 1, 1, 2, 2, 3, 3]
    rows, cols = [], []
    for i in range(B):
        for j in range(B):
            if i != j and labels[i] == labels[j]:
                rows.append(i)
                cols.append(j)
    row = jnp.asarray(rows, dtype=jnp.int32)
    col = jnp.asarray(cols, dtype=jnp.int32)

    ref = _reference_loss(out, row, col)

    # Default fast path: bf16 streams + bf16 MXU (f32 accumulation).
    loss_bf16 = cosine_loss(out, row, col)
    jax.block_until_ready(loss_bf16)
    assert jnp.allclose(loss_bf16, ref, atol=3e-2, rtol=5e-2), (loss_bf16, ref)

    # High-precision path: f32 streams + f32 MXU accumulation.
    loss_f32 = cosine_loss(out, row, col, mxu_dtype=jnp.float32)
    jax.block_until_ready(loss_f32)
    assert jnp.allclose(loss_f32, ref, atol=5e-3, rtol=1e-3), (loss_f32, ref)

    print("KERNEL_OK")
</pallas_src>

<mosaic_0001>
module attributes {stable_mosaic.version = 11 : i64} {
  func.func @_logz_kernel(%arg0: i32, %arg1: i32, %arg2: memref<8x128xbf16, #tpu.memory_space<vmem>>, %arg3: memref<8x128xbf16, #tpu.memory_space<vmem>>, %arg4: memref<8x1xf32, #tpu.memory_space<vmem>>, %arg5: memref<8x1xf32, #tpu.memory_space<vmem>>) attributes {dimension_semantics = [#tpu.dimension_semantics<parallel>, #tpu.dimension_semantics<arbitrary>], iteration_bounds = array<i64: 1, 1>, scalar_prefetch = 0 : i64, scratch_operands = 1 : i64, tpu.core_type = #tpu.core_type<tc>, window_params = [{transform_indices = @transform_0, window_bounds = array<i64: 8, 128>}, {transform_indices = @transform_1, window_bounds = array<i64: 8, 128>}, {transform_indices = @transform_2, window_bounds = array<i64: 8, 1>}]} {
    %c0_i32 = arith.constant 0 : i32
    %0 = arith.cmpi eq, %arg1, %c0_i32 : i32
    %1 = arith.extui %0 : i1 to i32
    %c0_i32_0 = arith.constant 0 : i32
    %2 = arith.cmpi ne, %1, %c0_i32_0 : i32
    scf.if %2 {
      %cst_16 = arith.constant 0.000000e+00 : f32
      %33 = vector.broadcast %cst_16 : f32 to vector<8x1xf32>
      %c0_17 = arith.constant 0 : index
      %c0_18 = arith.constant 0 : index
      %34 = vector.load %arg5[%c0_17, %c0_18] : memref<8x1xf32, #tpu.memory_space<vmem>>, vector<8x1xf32>
      tpu.vector_store %arg5[%c0_17, %c0_18], %33 {strides = array<i32>} : memref<8x1xf32, #tpu.memory_space<vmem>>, vector<8x1xf32>,
    } else {
    }
    %c0 = arith.constant 0 : index
    %c0_1 = arith.constant 0 : index
    %3 = vector.load %arg2[%c0, %c0_1] : memref<8x128xbf16, #tpu.memory_space<vmem>>, vector<8x128xbf16>
    %c0_2 = arith.constant 0 : index
    %c0_3 = arith.constant 0 : index
    %4 = vector.load %arg3[%c0_2, %c0_3] : memref<8x128xbf16, #tpu.memory_space<vmem>>, vector<8x128xbf16>
    %cst = arith.constant dense<0.000000e+00> : vector<8x8xf32>
    %5 = tpu.matmul %3, %4, %cst {dimension_numbers = #tpu.dot_dimension_numbers<[1], [1], [0], [0], [0, 0, 1, 0], [], []>} : vector<8x128xbf16>, vector<8x128xbf16>, vector<8x8xf32> -> vector<8x8xf32>
    %cst_4 = arith.constant 14.2857141 : f32
    %6 = vector.broadcast %cst_4 : f32 to vector<8x8xf32>
    %7 = arith.mulf %5, %6 : vector<8x8xf32>
    %c8_i32 = arith.constant 8 : i32
    %8 = arith.muli %arg0, %c8_i32 : i32
    %9 = tpu.iota {dimensions = array<i32: 0>} : vector<8x8xi32>
    %10 = vector.broadcast %8 : i32 to vector<8x8xi32>
    %11 = arith.addi %10, %9 : vector<8x8xi32>
    %c8_i32_5 = arith.constant 8 : i32
    %12 = arith.muli %arg1, %c8_i32_5 : i32
    %13 = tpu.iota {dimensions = array<i32: 1>} : vector<8x8xi32>
    %14 = vector.broadcast %12 : i32 to vector<8x8xi32>
    %15 = arith.addi %14, %13 : vector<8x8xi32>
    %16 = arith.cmpi ne, %11, %15 : vector<8x8xi32>
    %c8_i32_6 = arith.constant 8 : i32
    %17 = vector.broadcast %c8_i32_6 : i32 to vector<8x8xi32>
    %18 = arith.cmpi slt, %15, %17 : vector<8x8xi32>
    %19 = arith.andi %16, %18 : vector<8x8xi1>
    %cst_7 = arith.constant 14.2857141 : f32
    %20 = vector.broadcast %cst_7 : f32 to vector<8x8xf32>
    %21 = arith.subf %7, %20 : vector<8x8xf32>
    %22 = math.exp %21 : vector<8x8xf32>
    %cst_8 = arith.constant 0.000000e+00 : f32
    %23 = vector.broadcast %cst_8 : f32 to vector<8x8xf32>
    %24 = arith.select %19, %22, %23 : vector<8x8xi1>, vector<8x8xf32>
    %c0_9 = arith.constant 0 : index
    %c0_10 = arith.constant 0 : index
    %25 = vector.load %arg5[%c0_9, %c0_10] : memref<8x1xf32, #tpu.memory_space<vmem>>, vector<8x1xf32>
    %cst_11 = arith.constant dense<0.000000e+00> : vector<8xf32>
    %26 = vector.multi_reduction <add>, %24, %cst_11 [1] : vector<8x8xf32> to vector<8xf32>
    %27 = vector.shape_cast %26 : vector<8xf32> to vector<8x1xf32>
    %28 = arith.addf %25, %27 : vector<8x1xf32>
    %c0_12 = arith.constant 0 : index
    %c0_13 = arith.constant 0 : index
    %29 = vector.load %arg5[%c0_12, %c0_13] : memref<8x1xf32, #tpu.memory_space<vmem>>, vector<8x1xf32>
    tpu.vector_store %arg5[%c0_12, %c0_13], %28 {strides = array<i32>} : memref<8x1xf32, #tpu.memory_space<vmem>>, vector<8x1xf32>,
    %c0_i32_14 = arith.constant 0 : i32
    %30 = arith.cmpi eq, %arg1, %c0_i32_14 : i32
    %31 = arith.extui %30 : i1 to i32
    %c0_i32_15 = arith.constant 0 : i32
    %32 = arith.cmpi ne, %31, %c0_i32_15 : i32
    scf.if %32 {
      %c0_16 = arith.constant 0 : index
      %c0_17 = arith.constant 0 : index
      %33 = vector.load %arg5[%c0_16, %c0_17] : memref<8x1xf32, #tpu.memory_space<vmem>>, vector<8x1xf32>
      %34 = math.log %33 : vector<8x1xf32>
      %cst_18 = arith.constant 14.2857141 : f32
      %35 = vector.broadcast %cst_18 : f32 to vector<8x1xf32>
      %36 = arith.addf %35, %34 : vector<8x1xf32>
      %c0_19 = arith.constant 0 : index
      %c0_20 = arith.constant 0 : index
      %37 = vector.load %arg4[%c0_19, %c0_20] : memref<8x1xf32, #tpu.memory_space<vmem>>, vector<8x1xf32>
      tpu.vector_store %arg4[%c0_19, %c0_20], %36 {strides = array<i32>} : memref<8x1xf32, #tpu.memory_space<vmem>>, vector<8x1xf32>,
    } else {
    }
    return
  }
  func.func @transform_0(%arg0: i32, %arg1: i32) -> (i32, i32) {
    %c0_i32 = arith.constant 0 : i32
    %c0_i32_0 = arith.constant 0 : i32
    return %arg0, %c0_i32 : i32, i32
  }
  func.func @transform_1(%arg0: i32, %arg1: i32) -> (i32, i32) {
    %c0_i32 = arith.constant 0 : i32
    %c0_i32_0 = arith.constant 0 : i32
    return %arg1, %c0_i32 : i32, i32
  }
  func.func @transform_2(%arg0: i32, %arg1: i32) -> (i32, i32) {
    %c0_i32 = arith.constant 0 : i32
    %c0_i32_0 = arith.constant 0 : i32
    return %arg0, %c0_i32 : i32, i32
  }
}

</mosaic_0001>

<llo_original>
// kernel: tpu_custom_call.1
$region0: #{tpu_custom_call.1}
  #allocation0 [shape = 'u32[]', space=smem, size = 0x4, offset = 0x4, fixed_abs, tag = 'smem constant byte address 0x4 - core index']
  #allocation1 [shape = 'u32[144,128]{1,0:T(1,128)}', space=vmem, size = 0x12000, scoped, tag = 'internal scratch']
  #allocation2 [shape = 'f32[8,1]{1,0:T(8,128)}', space=vmem, size = 0x1000, scoped, tag = 'scratch operand']
  %s0 = inlined_call_operand.hbm [shape: bf16[8,128], index: 0, kind: input, shape index: {}]
  %s1 = inlined_call_operand.hbm [shape: bf16[8,128], index: 1, kind: input, shape index: {}]
  %s2 = inlined_call_operand.vmem [shape: f32[8,1], index: 2, kind: output, shape index: {}]
  %s3 = sld [smem:[#allocation0]]
  $region34: #{tpu_custom_call.1} parent=0
    _
  %s5 = ssub.s32 1, %s3
  %s6 = scalar_select 0, %s5, %s3
  $region1: #{tpu_custom_call.1} parent=0
    #allocation3 [shape = 'u8[2048]{0}', space=vmem, size = 0x800, scoped, tag = 'input window, operand 0, single buffered']
    #allocation4 [shape = 's32[1]{0}', space=sflag, size = 0x4, scoped, tag = 'scoped memory for tpu_custom_call.1']
    #allocation5 [shape = 'u8[2048]{0}', space=vmem, size = 0x800, scoped, tag = 'input window, operand 1, single buffered']
    #allocation6 [shape = 's32[1]{0}', space=sflag, size = 0x4, scoped, tag = 'scoped memory for tpu_custom_call.1']
    %7 = vsyncpa [#allocation4], 0
    %8 = vsyncpa [#allocation6], 0
    // Predicated region
    $region2: #{tpu_custom_call.1} parent=1 // pred_check
      _
    $region3: #{tpu_custom_call.1} parent=1 // pred_check_branch
      %10 = sbr.rel (0) target = $region5
    $region4: #{tpu_custom_call.1} parent=1 // pred_region
      %s12 = ssub.s32 64, 64
      %13 = vsyncadd [#allocation4], %s12
      %s15 = sshll.u32 [#allocation3], 4
      %s16 = int_to_ptr.vmem [resolvable:$true] %s15
      %18 = dma.hbm_to_vmem [thread:$0]  %s0, 64, %s16, [#allocation4]
    $region5: #{tpu_custom_call.1} parent=1 // pred_fallthru
      _
    // Predicated region
    $region6: #{tpu_custom_call.1} parent=1 // pred_check
      _
    $region7: #{tpu_custom_call.1} parent=1 // pred_check_branch
      %20 = sbr.rel (0) target = $region9
    $region8: #{tpu_custom_call.1} parent=1 // pred_region
      %s22 = ssub.s32 64, 64
      %23 = vsyncadd [#allocation6], %s22
      %s25 = sshll.u32 [#allocation5], 4
      %s26 = int_to_ptr.vmem [resolvable:$true] %s25
      %28 = dma.hbm_to_vmem [thread:$0]  %s1, 64, %s26, [#allocation6]
    $region9: #{tpu_custom_call.1} parent=1 // pred_fallthru
      _
    // Predicated region
    $region10: #{tpu_custom_call.1} parent=1 // pred_check
      _
    $region11: #{tpu_custom_call.1} parent=1 // pred_check_branch
      %30 = sbr.rel (0) target = $region13
    $region12: #{tpu_custom_call.1} parent=1 // pred_region
      %31 = dma.done [#allocation4], 64
    $region13: #{tpu_custom_call.1} parent=1 // pred_fallthru
      _
    // Predicated region
    $region14: #{tpu_custom_call.1} parent=1 // pred_check
      _
    $region15: #{tpu_custom_call.1} parent=1 // pred_check_branch
      %33 = sbr.rel (0) target = $region17
    $region16: #{tpu_custom_call.1} parent=1 // pred_region
      %34 = dma.done [#allocation6], 64
    $region17: #{tpu_custom_call.1} parent=1 // pred_fallthru
      _
    %p36 = scmp.eq.s32.totalorder 0, 0
    // Predicated region
    $region18: #{tpu_custom_call.1} parent=1 // pred_check
      %p37 = pneg %p36
    $region19: #{tpu_custom_call.1} parent=1 // pred_check_branch
      %39 = sbr.rel (%p37) target = $region21
    $region20: #{tpu_custom_call.1} parent=1 // pred_region
      %vm40 = vcmask 7168
      %41 = vst.msk [vmem:[#allocation2] sm:$0xff] %vm40, 0.0
    $region21: #{tpu_custom_call.1} parent=1 // pred_fallthru
      _
    %v42 = vld [vmem:[#allocation3] sm:$0xf]
    %v43 = vld [vmem:[#allocation5] sm:$0xf]
    %44 = vmatprep.subr.bf16.mxu0 0
    %45 = vmatpush1.bf16.xpose.msra.mxu0 %v43
    %46 = vmatprep.subr.bf16.mxu0 0
    %47 = vmatpush1.bf16.xpose.msra.mxu0 0
    %48 = vmatprep.subr.bf16.mxu0 0
    %49 = vmatpush1.bf16.xpose.msra.mxu0 0
    %50 = vmatprep.subr.bf16.mxu0 0
    %51 = vmatpush1.bf16.xpose.msra.mxu0 0
    %52 = vmatprep.subr.bf16.mxu0 0
    %53 = vmatpush1.bf16.xpose.msra.mxu0 0
    %54 = vmatprep.subr.bf16.mxu0 0
    %55 = vmatpush1.bf16.xpose.msra.mxu0 0
    %56 = vmatprep.subr.bf16.mxu0 0
    %57 = vmatpush1.bf16.xpose.msra.mxu0 0
    %58 = vmatprep.subr.bf16.mxu0 0
    %59 = vmatpush1.bf16.xpose.msra.mxu0 0
    %60 = vmatprep.subr.bf16.mxu0 0
    %61 = vmatpush1.bf16.xpose.msra.mxu0 0
    %62 = vmatprep.subr.bf16.mxu0 0
    %63 = vmatpush1.bf16.xpose.msra.mxu0 0
    %64 = vmatprep.subr.bf16.mxu0 0
    %65 = vmatpush1.bf16.xpose.msra.mxu0 0
    %66 = vmatprep.subr.bf16.mxu0 0
    %67 = vmatpush1.bf16.xpose.msra.mxu0 0
    %68 = vmatprep.subr.bf16.mxu0 0
    %69 = vmatpush1.bf16.xpose.msra.mxu0 0
    %70 = vmatprep.subr.bf16.mxu0 0
    %71 = vmatpush1.bf16.xpose.msra.mxu0 0
    %72 = vmatprep.subr.bf16.mxu0 0
    %73 = vmatpush1.bf16.xpose.msra.mxu0 0
    %74 = vmatprep.subr.bf16.mxu0 0
    %75 = vmatpush1.bf16.xpose.msra.mxu0 0
    %76 = vmatprep.mubr.bf16.mxu0 0
    %77 = vmatmul.mubr.bf16.gmra.mrb[0].mxu0 %v42
    %v78 = vpop.f32.mrb[0].mxu0
    %v79 = vadd.f32 0.0, %v78
    %v80 = vpop.f32.mrb[0].mxu0
    %v81 = vpop.f32.mrb[0].mxu0
    %v82 = vpop.f32.mrb[0].mxu0
    %83 = vdwg.mxu0
    %v84 = vmul.f32 %v79, 14.285714
    %s85 = smul.u32 0, 8
    %v86 = vlaneseq
    %v87 = vshrl.u32 %v86, 7
    %v88 = vstv %s85
    %v89 = vadd.s32 %v88, %v87
    %s90 = smul.u32 0, 8
    %v91 = vlaneseq
    %v92 = vand.u32 %v91, 127
    %v93 = vstv %s90
    %v94 = vadd.s32 %v93, %v92
    %vm95 = vcmp.ne.s32.totalorder %v89, %v94
    %vm96 = vcmp.lt.s32.totalorder %v94, 8
    %vm97 = vmand %vm95, %vm96
    %v98 = vsub.f32 %v84, 14.285714
    %v99 = vmul.f32 %v98, 1.442695
    %v100 = vpow.pop %v99
    %v101 = vsel %vm97, %v100, 0.0
    %v102 = vld [vmem:[#allocation2] sm:$0xff]
    %vm103 = vcmask 64512
    %v104 = vsel %vm103, %v101, 0.0
    %105 = vadd.xlane.f32.xlu0 %v104
    %v106 = vpop.xlane.xlu0 %105
    %v107 = vadd.f32 %v102, %v106
    %vm108 = vcmask 7168
    %109 = vst.msk [vmem:[#allocation2] sm:$0xff] %vm108, %v107
    // Predicated region
    $region22: #{tpu_custom_call.1} parent=1 // pred_check
      %p110 = pneg %p36
    $region23: #{tpu_custom_call.1} parent=1 // pred_check_branch
      %112 = sbr.rel (%p110) target = $region25
    $region24: #{tpu_custom_call.1} parent=1 // pred_region
      %v113 = vld [vmem:[#allocation2] sm:$0xff]
      %v114 = vlog2.pop %v113
      %v115 = vmul.f32 %v114, 0.6931472
      %v116 = vadd.f32 %v115, 14.285714
      %117 = vst.msk [vmem:[%s2] sm:$0xff] %vm108, %v116
    $region25: #{tpu_custom_call.1} parent=1 // pred_fallthru
      _
    // Predicated region
    $region26: #{tpu_custom_call.1} parent=1 // pred_check
      _
    $region27: #{tpu_custom_call.1} parent=1 // pred_check_branch
      %119 = sbr.rel (0) target = $region29
    $region28: #{tpu_custom_call.1} parent=1 // pred_region
      _
    $region29: #{tpu_custom_call.1} parent=1 // pred_fallthru
      _
    // Predicated region
    $region30: #{tpu_custom_call.1} parent=1 // pred_check
      _
    $region31: #{tpu_custom_call.1} parent=1 // pred_check_branch
      %121 = sbr.rel (0) target = $region33
    $region32: #{tpu_custom_call.1} parent=1 // pred_region
      _
    $region33: #{tpu_custom_call.1} parent=1 // pred_fallthru
      _
    %122 = vsyncpa [#allocation4], 1
    %123 = vsyncpa [#allocation6], 1

</llo_original>
